<compile_context>
chip_gen: v7x
topology: tpu7x:2x2x1
jax: 0.10.0
libtpu: 0.0.40
codegen_flags: <defaults>
</compile_context>

<pallas_src>
import functools

import jax
import jax.numpy as jnp
from jax.experimental import pallas as pl
from jax.experimental.pallas import tpu as pltpu

_LANES = 128
_NUM_CORE_SPLITS = 2                      # pass-1 reduction split (v7x megacore)
_FUSED_MAX_PADDED_ELEMS = 1024 * 1024     # ~4 MiB f32 whole-array-in-VMEM cap
_FUSED_VMEM_LIMIT = 32 * 1024 * 1024      # explicit scoped-VMEM for fused call
_VMEM_BUDGET_BYTES = 8 * 1024 * 1024      # tiled double-buffered working set


# ------------------------------------------------------------- fused path --
def _fused_kernel(x_ref, o_ref, *, scale):
    x = x_ref[...].astype(jnp.float32)
    max_v = jnp.max(x)
    v0 = jnp.floor((x / max_v) * scale)
    # v0 * (max_v / scale) == (v0 / scale) * max_v bit-exactly (scale = 2**Nq).
    o_ref[...] = (v0 * (max_v * (1.0 / scale))).astype(o_ref.dtype)


# --------------------------------------------------- pass 1: global max ----
def _max_kernel(x_ref, m_ref, acc_ref, *, rows, tile_rows, steps_per_core,
                n_blk):
    c = pl.program_id(0)          # core-split index ("parallel")
    i = pl.program_id(1)          # step within this split ("arbitrary")

    @pl.when(i == 0)
    def _():
        acc_ref[...] = jnp.full((8, _LANES), -jnp.inf, jnp.float32)

    x = x_ref[...].astype(jnp.float32)
    fold = tile_rows // 8

    def _update(xv):
        # Fold (tile_rows,128) -> (8,128): pure elementwise VPU max, keeps the
        # accumulator at a single vreg (4 KiB) instead of a full tile.
        part = xv.reshape(fold, 8, _LANES).max(axis=0)
        acc_ref[...] = jnp.maximum(acc_ref[...], part)

    if rows % tile_rows != 0:
        # Only the (single) partial last block needs masking; pay the
        # iota+select only there instead of on every tile.
        blk = jnp.minimum(c * steps_per_core + i, n_blk - 1)
        is_last_blk = blk == (n_blk - 1)

        @pl.when(jnp.logical_not(is_last_blk))
        def _():
            _update(x)

        @pl.when(is_last_blk)
        def _():
            row = (jax.lax.broadcasted_iota(jnp.int32, x.shape, 0)
                   + blk * tile_rows)
            _update(jnp.where(row < rows, x, -jnp.inf))
    else:
        _update(x)

    @pl.when(i == steps_per_core - 1)
    def _():
        m_ref[0, 0] = jnp.max(acc_ref[...])


# --------------------------------------------- pass 2: elementwise quant ---
def _quant_kernel(m_ref, x_ref, o_ref, *, scale, n_partials):
    max_v = m_ref[0, 0]
    for p in range(1, n_partials):
        max_v = jnp.maximum(max_v, m_ref[p, 0])
    x = x_ref[...].astype(jnp.float32)
    v0 = jnp.floor((x / max_v) * scale)        # keep /max_v: bit-exact vs ref
    o_ref[...] = (v0 * (max_v * (1.0 / scale))).astype(o_ref.dtype)


# ------------------------------------------------------------------ utils --
def _clamp_tile_rows(tile_rows, rows, itemsize):
    # Round to the dtype's sublane packing (f32:8, bf16:16, int8/fp8:32).
    pack = 8 * max(1, 4 // itemsize)
    tr = min(int(tile_rows), max(pack, (rows // pack) * pack))
    tr = max(pack, (tr // pack) * pack)

    def _need(t):
        blk_in = t * _LANES * itemsize
        p1 = 2 * blk_in + 8 * _LANES * 4     # dbl-buffered input + 1-vreg acc
        p2 = 4 * blk_in                      # dbl-buffered input + output
        return max(p1, p2)

    while tr > pack and _need(tr) > _VMEM_BUDGET_BYTES:
        tr = max(pack, (tr // 2 // pack) * pack)
    return tr


# ----------------------------------------------------------------- wrapper --
@functools.partial(jax.jit, static_argnames=("Nq", "tile_rows"))
def quantization(xyz, Nq=6, tile_rows=4096):
    scale = float(1 << Nq)
    orig_shape = xyz.shape
    orig_dtype = xyz.dtype
    itemsize = jnp.dtype(orig_dtype).itemsize

    total = 1
    for d in orig_shape:
        total *= int(d)

    flat = xyz.reshape(-1)

    # ---------------- fused whole-array-in-VMEM path (small/mid tensors) ---
    if total % _LANES == 0:
        view = flat.reshape(total // _LANES, _LANES)      # lane-dense, free
    else:
        view = flat.reshape(1, total)
    padded_elems = (((view.shape[0] + 7) // 8) * 8) * (
        ((view.shape[1] + _LANES - 1) // _LANES) * _LANES)

    if padded_elems <= _FUSED_MAX_PADDED_ELEMS:
        out = pl.pallas_call(
            functools.partial(_fused_kernel, scale=scale),
            out_shape=jax.ShapeDtypeStruct(view.shape, orig_dtype),
            compiler_params=pltpu.CompilerParams(
                vmem_limit_bytes=_FUSED_VMEM_LIMIT),
            cost_estimate=pl.CostEstimate(
                flops=5 * total, transcendentals=0,
                bytes_accessed=2 * total * itemsize),
        )(view)
        return out.reshape(orig_shape)

    # ---------------- tiled two-pass path (large tensors) ------------------
    rows = total // _LANES
    aligned = rows * _LANES
    if aligned != total:
        # Run the streaming passes over the 128-aligned prefix; the <128-elem
        # tail is handled with plain jnp below (no full-array pad copy).
        main = flat[:aligned]
        tail = flat[aligned:]
    else:
        main = flat
        tail = None
    x2d = main.reshape(rows, _LANES)

    tr = _clamp_tile_rows(tile_rows, rows, itemsize)
    n_blk = pl.cdiv(rows, tr)
    spc = pl.cdiv(n_blk, _NUM_CORE_SPLITS)    # steps per core-split

    # pass 1: global max -> (_NUM_CORE_SPLITS, 1) f32 partials in SMEM.
    # Leading "parallel" axis lets v7x's two TensorCores each stream half the
    # rows; the jnp.minimum clamp makes the odd-block duplicate harmless
    # (max is idempotent).
    partials = pl.pallas_call(
        functools.partial(_max_kernel, rows=rows, tile_rows=tr,
                          steps_per_core=spc, n_blk=n_blk),
        out_shape=jax.ShapeDtypeStruct((_NUM_CORE_SPLITS, 1), jnp.float32),
        grid_spec=pltpu.PrefetchScalarGridSpec(
            num_scalar_prefetch=0,
            grid=(_NUM_CORE_SPLITS, spc),
            in_specs=[pl.BlockSpec(
                (tr, _LANES),
                lambda c, i: (jnp.minimum(c * spc + i, n_blk - 1), 0))],
            out_specs=pl.BlockSpec((1, 1), lambda c, i: (c, 0),
                                   memory_space=pltpu.SMEM),
            scratch_shapes=[pltpu.VMEM((8, _LANES), jnp.float32)],
        ),
        compiler_params=pltpu.CompilerParams(
            dimension_semantics=("parallel", "arbitrary")),
        cost_estimate=pl.CostEstimate(
            flops=aligned, transcendentals=0,
            bytes_accessed=aligned * itemsize + 8),
    )(x2d)

    if tail is not None:
        # Fold the tail's max into both partials (broadcast max; still (2,1)).
        partials = jnp.maximum(partials, jnp.max(tail).astype(jnp.float32))

    # pass 2: elementwise quantization using the SMEM partial maxes.
    out2d = pl.pallas_call(
        functools.partial(_quant_kernel, scale=scale,
                          n_partials=_NUM_CORE_SPLITS),
        out_shape=jax.ShapeDtypeStruct((rows, _LANES), orig_dtype),
        grid_spec=pltpu.PrefetchScalarGridSpec(
            num_scalar_prefetch=0,
            grid=(n_blk,),
            in_specs=[
                pl.BlockSpec((_NUM_CORE_SPLITS, 1), lambda i: (0, 0),
                             memory_space=pltpu.SMEM),
                pl.BlockSpec((tr, _LANES), lambda i: (i, 0)),
            ],
            out_specs=pl.BlockSpec((tr, _LANES), lambda i: (i, 0)),
        ),
        compiler_params=pltpu.CompilerParams(
            dimension_semantics=("parallel",)),
        cost_estimate=pl.CostEstimate(
            flops=4 * aligned, transcendentals=0,
            bytes_accessed=2 * aligned * itemsize + 8),
    )(partials, x2d)

    if tail is not None:
        # TODO(synk): the output stitch still costs one extra HBM copy of the
        # main body; only hit when the flattened size is not a multiple of 128.
        max_v = jnp.max(partials)
        v0 = jnp.floor((tail.astype(jnp.float32) / max_v) * scale)
        tail_q = (v0 * (max_v * (1.0 / scale))).astype(orig_dtype)
        out = jnp.concatenate([out2d.reshape(-1), tail_q]).reshape(orig_shape)
    else:
        out = out2d.reshape(orig_shape)
    return out


# --------------------------------------------------------------- reference --
def _reference(xyz, Nq=6):
    max_v = jnp.max(xyz)
    v0 = xyz / max_v
    v0 = jnp.floor(v0 * (1 << Nq))
    return v0 / (1 << Nq) * max_v


if __name__ == "__main__":
    key = jax.random.PRNGKey(0)
    ks = jax.random.split(key, 5)

    tests = [
        # 1) NCHW-like small tensor           -> fused whole-array path.
        jax.random.uniform(ks[0], (2, 4, 16, 16), jnp.float32, 0.0, 10.0),
        # 2) odd, non-lane-aligned small      -> fused (1, total) view.
        jax.random.uniform(ks[1], (3, 5, 17, 19), jnp.float32, 0.0, 5.0),
        # 3) mid-size (1.2 MiB)               -> fused (raised threshold).
        jax.random.uniform(ks[2], (4, 8, 96, 100), jnp.float32, 0.0, 7.0),
        # 4) large, 128-aligned (4.1 MiB)     -> tiled two-pass path.
        jax.random.uniform(ks[3], (4, 8, 160, 208), jnp.float32, 0.0, 7.0),
        # 5) large, non-128-multiple (4.1 MiB)-> tiled path + jnp tail stitch.
        jax.random.uniform(ks[4], (3, 701, 509), jnp.float32, 0.0, 3.0),
    ]

    ok = True
    for x in tests:
        out = jax.block_until_ready(quantization(x, Nq=6))
        ref = _reference(x, Nq=6)
        ok &= (out.shape == x.shape and out.dtype == x.dtype)
        ok &= bool(jnp.allclose(out, ref, atol=1e-5, rtol=1e-5))
    assert ok, "mismatch vs reference"

    print("KERNEL_OK")
</pallas_src>

<mosaic_0001>
module attributes {stable_mosaic.version = 11 : i64} {
  func.func @_fused_kernel(%arg0: memref<16x128xf32, #tpu.memory_space<vmem>>, %arg1: memref<16x128xf32, #tpu.memory_space<vmem>>) attributes {dimension_semantics = [], scalar_prefetch = 0 : i64, scratch_operands = 0 : i64, tpu.core_type = #tpu.core_type<tc>} {
    %c0 = arith.constant 0 : index
    %c0_0 = arith.constant 0 : index
    %0 = vector.load %arg0[%c0, %c0_0] : memref<16x128xf32, #tpu.memory_space<vmem>>, vector<16x128xf32>
    %1 = vector.shape_cast %0 : vector<16x128xf32> to vector<1x16x128xf32>
    %cst = arith.constant dense<0xFF800000> : vector<1xf32>
    %2 = vector.multi_reduction <maximumf>, %1, %cst [1, 2] : vector<1x16x128xf32> to vector<1xf32>
    %3 = vector.shape_cast %2 : vector<1xf32> to vector<1x1x1xf32>
    %4 = vector.extract %3[0, 0, 0] : f32 from vector<1x1x1xf32>
    %5 = vector.broadcast %4 : f32 to vector<16x128xf32>
    %6 = arith.divf %0, %5 : vector<16x128xf32>
    %cst_1 = arith.constant 6.400000e+01 : f32
    %7 = vector.broadcast %cst_1 : f32 to vector<16x128xf32>
    %8 = arith.mulf %6, %7 : vector<16x128xf32>
    %9 = math.floor %8 : vector<16x128xf32>
    %cst_2 = arith.constant 1.562500e-02 : f32
    %10 = arith.mulf %4, %cst_2 : f32
    %11 = vector.broadcast %10 : f32 to vector<16x128xf32>
    %12 = arith.mulf %9, %11 : vector<16x128xf32>
    %c0_3 = arith.constant 0 : index
    %c0_4 = arith.constant 0 : index
    %13 = vector.load %arg1[%c0_3, %c0_4] : memref<16x128xf32, #tpu.memory_space<vmem>>, vector<16x128xf32>
    tpu.vector_store %arg1[%c0_3, %c0_4], %12 {strides = array<i32>} : memref<16x128xf32, #tpu.memory_space<vmem>>, vector<16x128xf32>,
    return
  }
}

</mosaic_0001>

<llo_original>
// kernel: quantization.1
$region0: #{quantization.1}
  #allocation0 [shape = 'u32[]', space=smem, size = 0x4, offset = 0x4, fixed_abs, tag = 'smem constant byte address 0x4 - core index']
  #allocation1 [shape = 'u32[144,128]{1,0:T(1,128)}', space=vmem, size = 0x12000, scoped, tag = 'internal scratch']
  %s0 = inlined_call_operand.vmem [shape: f32[16,128], index: 0, kind: input, shape index: {}]
  %s1 = inlined_call_operand.vmem [shape: f32[16,128], index: 1, kind: output, shape index: {}]
  %s2 = sld [smem:[#allocation0]]
  $region14: #{quantization.1} parent=0
    _
  %s4 = ssub.s32 1, %s2
  %s5 = scalar_select 0, %s4, %s2
  // Predicated region
  $region2: #{quantization.1} parent=0 // pred_check
    _
  $region3: #{quantization.1} parent=0 // pred_check_branch
    %7 = sbr.rel (0) target = $region5
  $region4: #{quantization.1} parent=0 // pred_region
    _
  $region5: #{quantization.1} parent=0 // pred_fallthru
    _
  %v8 = vld [vmem:[%s0] sm:$0xff]
  %v9 = vld [vmem:[%s0 + $0x8] sm:$0xff]
  %v10 = vmax.f32 %v8, %v9
  %11 = vmax.xlane.f32.xlu0 %v10
  %v12 = vpop.xlane.xlu0 %11
  %v13 = vrot.slane %v12, 4
  %v14 = vmax.f32 %v12, %v13
  %v15 = vrot.slane %v14, 2
  %v16 = vmax.f32 %v14, %v15
  %v17 = vrot.slane %v16, 1
  %v18 = vmax.f32 %v16, %v17
  %s19 = vtos %v18
  %v20 = vstv %s19
  %v21 = vrcp.pop %v20
  %v22 = vmul.f32 %v8, %v21
  %v23 = vmul.f32 %v9, %v21
  %v24 = vmul.f32 %v22, 64.0
  %v25 = vmul.f32 %v23, 64.0
  %v26 = vfloor.f32 %v24
  %v27 = vfloor.f32 %v25
  %s28 = smul.f32 %s19, 0.015625
  %v29 = vstv %s28
  %v30 = vmul.f32 %v26, %v29
  %v31 = vmul.f32 %v27, %v29
  %32 = vst [vmem:[%s1] sm:$0xff] %v30
  %33 = vst [vmem:[%s1 + $0x8] sm:$0xff] %v31
  // Predicated region
  $region6: #{quantization.1} parent=0 // pred_check
    _
  $region7: #{quantization.1} parent=0 // pred_check_branch
    %35 = sbr.rel (0) target = $region9
  $region8: #{quantization.1} parent=0 // pred_region
    _
  $region9: #{quantization.1} parent=0 // pred_fallthru
    _
  // Predicated region
  $region10: #{quantization.1} parent=0 // pred_check
    _
  $region11: #{quantization.1} parent=0 // pred_check_branch
    %37 = sbr.rel (0) target = $region13
  $region12: #{quantization.1} parent=0 // pred_region
    _
  $region13: #{quantization.1} parent=0 // pred_fallthru
    _

</llo_original>
